<compile_context>
chip_gen: v5e
topology: v5e:2x2
jax: 0.10.0
libtpu: 0.0.40
codegen_flags: <defaults>
</compile_context>

<pallas_src>
import functools

import jax
import jax.numpy as jnp
from jax.experimental import pallas as pl
from jax.experimental.pallas import tpu as pltpu


def _disp_ce_kernel(prob_ref, samp_ref, gt_ref, mask_ref, sum_ref, cnt_ref, *, hw):
    q = pl.program_id(1)          # pixel-range partition (v7x megacore sharding)
    p = pl.program_id(2)          # pixel tile within the partition (sequential)
    npp = pl.num_programs(2)

    @pl.when(p == 0)
    def _():
        sum_ref[...] = jnp.zeros_like(sum_ref)
        cnt_ref[...] = jnp.zeros_like(cnt_ref)

    prob = prob_ref[...].astype(jnp.float32)                   # (D, T) logits in f32
    cmp_dt = jnp.promote_types(samp_ref.dtype, gt_ref.dtype)   # torch promotion for |samp - gt|
    samp = samp_ref[...].astype(cmp_dt)                        # (D, T)
    gt = gt_ref[...].astype(cmp_dt)                            # (1, T)

    D, T = prob.shape
    # Ragged-tail handling: lanes whose global pixel index >= H*W contribute nothing.
    lane = jax.lax.broadcasted_iota(jnp.int32, (1, T), 1)
    start = (q * npp + p) * T
    in_bounds = (start + lane) < hw
    valid = jnp.logical_and(in_bounds, mask_ref[...] != 0)     # (1, T) bool

    # label = argmin_d |samp - gt| (first occurrence on ties, matching torch.argmin).
    diff = jnp.abs(samp - gt)                                  # (D, T)
    d_idx = jax.lax.broadcasted_iota(jnp.int32, (D, 1), 0)     # (D, 1), reused for both selects
    min_diff = jnp.min(diff, axis=0, keepdims=True)            # (1, T)
    # NOTE: exact float equality is intentional — min_diff comes from the same values, so the
    # smallest index attaining the min is picked (torch.argmin tie-break).  A NaN in diff at a
    # *valid* pixel would make no lane match and the CE silently falls back to lse alone.
    label = jnp.min(jnp.where(diff == min_diff, d_idx, D),
                    axis=0, keepdims=True)                     # (1, T) int32

    # Cross entropy with logits: lse(prob) - prob[label]   (reductions over sublanes / XLU).
    picked = jnp.sum(jnp.where(d_idx == label, prob, 0.0),
                     axis=0, keepdims=True)                    # (1, T)
    m = jnp.max(prob, axis=0, keepdims=True)
    lse = m + jnp.log(jnp.sum(jnp.exp(prob - m), axis=0, keepdims=True))

    # where-based masking so garbage in out-of-bounds lanes (incl. NaN/Inf) never propagates.
    sum_ref[...] = sum_ref[...] + jnp.where(valid, lse - picked, 0.0)
    cnt_ref[...] = cnt_ref[...] + valid.astype(jnp.float32)


def _vmem_limit_bytes():
    """Generation-aware scoped-VMEM limit with headroom (v7x: 64 MiB phys; v5e/v6e: 128 MiB)."""
    phys = 64 * 1024 * 1024  # conservative default == v7x per-TensorCore physical VMEM
    get_info = getattr(pltpu, "get_tpu_info", None)
    if get_info is not None:
        try:
            phys = int(getattr(get_info(), "vmem_capacity_bytes", phys))
        except Exception:
            pass
    return min(phys * 3 // 4, phys - (8 << 20))   # ~25% headroom for compiler-internal scratch


def _choose_tiling(hw, t_cap):
    """Pick lane tile T (multiple of 128, or the full extent), partition count P, tiles/partition."""
    t_cap = max(128, (t_cap // 128) * 128)
    if hw <= t_cap:
        # Whole image fits in one tile.  Split at a 128-aligned midpoint when big enough so both
        # v7x TensorCores get work (harmless on 1-TC v5e/v6e).
        if hw >= 2048:
            half = ((-(-hw // 2) + 127) // 128) * 128
            if -(-hw // half) == 2:
                return half, 2, 1
        return hw, 1, 1
    n = -(-hw // t_cap)
    if n % 2 == 0:
        return t_cap, 2, n // 2
    # Odd tile count: shrink T slightly so the count becomes even (keeps both v7x cores busy).
    t2 = max(128, ((-(-hw // (n + 1)) + 127) // 128) * 128)
    n2 = -(-hw // t2)
    if n2 % 2 == 0:
        return t2, 2, n2 // 2
    return t_cap, 1, n


@functools.partial(jax.jit, static_argnames=("max_tile",))
def disparity_classification_loss(prob_volume, sample_grid, gt_disp, valid_mask,
                                  max_tile=16384):
    """reduction='mean' (module default)."""
    # TODO(synk): reduction='sum'/'none' variants of nn.CrossEntropyLoss are not implemented.
    B, D, H, W = prob_volume.shape
    HW = H * W

    # Free (contiguous) reshapes — keep the native NCHW layout. No transpose, no pad.
    prob = prob_volume.reshape(B, D, HW)
    samp = sample_grid.reshape(B, D, HW)
    gt = gt_disp.reshape(B, 1, HW)
    mask = valid_mask.reshape(B, 1, HW)
    if mask.dtype == jnp.bool_:
        mask = mask.astype(jnp.int8)   # 1 B/pixel; no 4 B/pixel f32 materialization in HBM

    # VMEM budget: 2 pipeline buffers x 2 big (D,T) inputs in their native dtype, plus ~6 live
    # (D,T) f32-equivalent intermediates in-kernel, plus small (1,T) arrays.  Sized against the
    # generation-specific scoped-VMEM limit, which is also handed to the compiler below.
    vmem_limit = int(_vmem_limit_bytes())
    budget = max(8 << 20, vmem_limit - (4 << 20))
    in_bytes = max(prob.dtype.itemsize, samp.dtype.itemsize)
    per_lane_bytes = D * (4 * in_bytes + 24) + 64
    t_budget = max(128, (budget // per_lane_bytes // 128) * 128)

    T, P, npp = _choose_tiling(HW, min(max_tile, t_budget))

    def in_map(b, q, p):
        return (b, 0, q * npp + p)

    def out_map(b, q, p):
        return (b, q, 0, 0)

    partial_shape = jax.ShapeDtypeStruct((B, P, 1, T), jnp.float32)

    sums, cnts = pl.pallas_call(
        functools.partial(_disp_ce_kernel, hw=HW),
        out_shape=(partial_shape, partial_shape),
        grid_spec=pltpu.PrefetchScalarGridSpec(
            num_scalar_prefetch=0,
            grid=(B, P, npp),
            in_specs=[
                pl.BlockSpec((None, D, T), in_map),   # prob_volume  [B, D, HW]
                pl.BlockSpec((None, D, T), in_map),   # sample_grid  [B, D, HW]
                pl.BlockSpec((None, 1, T), in_map),   # gt_disp      [B, 1, HW]
                pl.BlockSpec((None, 1, T), in_map),   # valid_mask   [B, 1, HW] (int8)
            ],
            out_specs=(
                pl.BlockSpec((None, None, 1, T), out_map),  # per-(b, partition) CE sums
                pl.BlockSpec((None, None, 1, T), out_map),  # per-(b, partition) valid counts
            ),
        ),
        compiler_params=pltpu.CompilerParams(
            dimension_semantics=("parallel", "parallel", "arbitrary"),
            vmem_limit_bytes=vmem_limit),
    )(prob, samp, gt, mask)

    # reduction='mean': sum(CE over valid pixels) / count(valid pixels).
    # NOTE: yields NaN if no pixel is valid, matching PyTorch mean-reduction over an empty set.
    return jnp.sum(sums) / jnp.sum(cnts)


def _reference_loss(prob_volume, sample_grid, gt_disp, valid_mask):
    """Pure-JAX reference of the torch semantics (reduction='mean')."""
    gt = gt_disp[:, 0]                                      # [B,H,W]
    mask = valid_mask[:, 0].astype(jnp.float32)             # [B,H,W]
    diff = jnp.abs(sample_grid - gt[:, None])               # [B,D,H,W]
    labels = jnp.argmin(diff, axis=1)                       # [B,H,W]
    logits = jnp.transpose(prob_volume, (0, 2, 3, 1))       # [B,H,W,D]
    lse = jax.scipy.special.logsumexp(logits, axis=-1)      # [B,H,W]
    picked = jnp.take_along_axis(logits, labels[..., None], axis=-1)[..., 0]
    ce = lse - picked
    return jnp.sum(ce * mask) / jnp.sum(mask)


if __name__ == "__main__":
    key = jax.random.PRNGKey(0)
    B, D, H, W = 2, 32, 16, 16
    k1, k2, k3, k4 = jax.random.split(key, 4)

    prob_volume = jax.random.normal(k1, (B, D, H, W), dtype=jnp.float32)
    base = jnp.arange(D, dtype=jnp.float32).reshape(1, D, 1, 1)
    sample_grid = base + 0.1 * jax.random.normal(k2, (B, D, H, W), dtype=jnp.float32)
    gt_disp = jax.random.uniform(k3, (B, 1, H, W), dtype=jnp.float32,
                                 minval=0.0, maxval=float(D - 1))
    valid_mask = jax.random.uniform(k4, (B, 1, H, W)) > 0.3

    loss = disparity_classification_loss(prob_volume, sample_grid, gt_disp, valid_mask)
    jax.block_until_ready(loss)

    ref = _reference_loss(prob_volume, sample_grid, gt_disp, valid_mask)
    assert jnp.allclose(loss, ref, rtol=1e-5, atol=1e-5), (loss, ref)

    print("KERNEL_OK")
</pallas_src>

<mosaic_0001>
module attributes {stable_mosaic.version = 11 : i64} {
  func.func @_disp_ce_kernel(%arg0: i32, %arg1: i32, %arg2: i32, %arg3: memref<1x32x256xf32, #tpu.memory_space<vmem>>, %arg4: memref<1x32x256xf32, #tpu.memory_space<vmem>>, %arg5: memref<1x1x256xf32, #tpu.memory_space<vmem>>, %arg6: memref<1x1x256xi8, #tpu.memory_space<vmem>>, %arg7: memref<1x1x1x256xf32, #tpu.memory_space<vmem>>, %arg8: memref<1x1x1x256xf32, #tpu.memory_space<vmem>>) attributes {dimension_semantics = [#tpu.dimension_semantics<parallel>, #tpu.dimension_semantics<parallel>, #tpu.dimension_semantics<arbitrary>], iteration_bounds = array<i64: 2, 1, 1>, scalar_prefetch = 0 : i64, scratch_operands = 0 : i64, tpu.core_type = #tpu.core_type<tc>, window_params = [{transform_indices = @transform_0, window_bounds = array<i64: 1, 32, 256>}, {transform_indices = @transform_1, window_bounds = array<i64: 1, 32, 256>}, {transform_indices = @transform_2, window_bounds = array<i64: 1, 1, 256>}, {transform_indices = @transform_3, window_bounds = array<i64: 1, 1, 256>}, {transform_indices = @transform_4, window_bounds = array<i64: 1, 1, 1, 256>}, {transform_indices = @transform_5, window_bounds = array<i64: 1, 1, 1, 256>}]} {
    %c0_i32 = arith.constant 0 : i32
    %0 = arith.cmpi eq, %arg2, %c0_i32 : i32
    %1 = arith.extui %0 : i1 to i32
    %c0_i32_0 = arith.constant 0 : i32
    %2 = arith.cmpi ne, %1, %c0_i32_0 : i32
    scf.if %2 {
      %cst_35 = arith.constant 0.000000e+00 : f32
      %69 = vector.broadcast %cst_35 : f32 to vector<1x256xf32>
      %c0_36 = arith.constant 0 : index
      %c0_37 = arith.constant 0 : index
      %c0_38 = arith.constant 0 : index
      %c0_39 = arith.constant 0 : index
      %70 = vector.load %arg7[%c0_36, %c0_37, %c0_38, %c0_39] : memref<1x1x1x256xf32, #tpu.memory_space<vmem>>, vector<1x1x1x256xf32>
      %71 = vector.shape_cast %70 : vector<1x1x1x256xf32> to vector<1x256xf32>
      %72 = vector.shape_cast %69 : vector<1x256xf32> to vector<1x1x1x256xf32>
      tpu.vector_store %arg7[%c0_36, %c0_37, %c0_38, %c0_39], %72 {strides = array<i32>} : memref<1x1x1x256xf32, #tpu.memory_space<vmem>>, vector<1x1x1x256xf32>,
      %cst_40 = arith.constant 0.000000e+00 : f32
      %73 = vector.broadcast %cst_40 : f32 to vector<1x256xf32>
      %c0_41 = arith.constant 0 : index
      %c0_42 = arith.constant 0 : index
      %c0_43 = arith.constant 0 : index
      %c0_44 = arith.constant 0 : index
      %74 = vector.load %arg8[%c0_41, %c0_42, %c0_43, %c0_44] : memref<1x1x1x256xf32, #tpu.memory_space<vmem>>, vector<1x1x1x256xf32>
      %75 = vector.shape_cast %74 : vector<1x1x1x256xf32> to vector<1x256xf32>
      %76 = vector.shape_cast %73 : vector<1x256xf32> to vector<1x1x1x256xf32>
      tpu.vector_store %arg8[%c0_41, %c0_42, %c0_43, %c0_44], %76 {strides = array<i32>} : memref<1x1x1x256xf32, #tpu.memory_space<vmem>>, vector<1x1x1x256xf32>,
    } else {
    }
    %c0 = arith.constant 0 : index
    %c0_1 = arith.constant 0 : index
    %c0_2 = arith.constant 0 : index
    %3 = vector.load %arg3[%c0, %c0_1, %c0_2] : memref<1x32x256xf32, #tpu.memory_space<vmem>>, vector<1x32x256xf32>
    %4 = vector.shape_cast %3 : vector<1x32x256xf32> to vector<32x256xf32>
    %c0_3 = arith.constant 0 : index
    %c0_4 = arith.constant 0 : index
    %c0_5 = arith.constant 0 : index
    %5 = vector.load %arg4[%c0_3, %c0_4, %c0_5] : memref<1x32x256xf32, #tpu.memory_space<vmem>>, vector<1x32x256xf32>
    %6 = vector.shape_cast %5 : vector<1x32x256xf32> to vector<32x256xf32>
    %c0_6 = arith.constant 0 : index
    %c0_7 = arith.constant 0 : index
    %c0_8 = arith.constant 0 : index
    %7 = vector.load %arg5[%c0_6, %c0_7, %c0_8] : memref<1x1x256xf32, #tpu.memory_space<vmem>>, vector<1x1x256xf32>
    %8 = vector.shape_cast %7 : vector<1x1x256xf32> to vector<1x256xf32>
    %9 = tpu.iota {dimensions = array<i32: 1>} : vector<1x256xi32>
    %c1_i32 = arith.constant 1 : i32
    %10 = arith.muli %arg1, %c1_i32 : i32
    %11 = arith.addi %10, %arg2 : i32
    %c256_i32 = arith.constant 256 : i32
    %12 = arith.muli %11, %c256_i32 : i32
    %13 = vector.broadcast %12 : i32 to vector<1x256xi32>
    %14 = arith.addi %13, %9 : vector<1x256xi32>
    %c256_i32_9 = arith.constant 256 : i32
    %15 = vector.broadcast %c256_i32_9 : i32 to vector<1x256xi32>
    %16 = arith.cmpi slt, %14, %15 : vector<1x256xi32>
    %c0_10 = arith.constant 0 : index
    %c0_11 = arith.constant 0 : index
    %c0_12 = arith.constant 0 : index
    %17 = vector.load %arg6[%c0_10, %c0_11, %c0_12] : memref<1x1x256xi8, #tpu.memory_space<vmem>>, vector<1x1x256xi8>
    %18 = vector.shape_cast %17 : vector<1x1x256xi8> to vector<1x256xi8>
    %c0_i8 = arith.constant 0 : i8
    %19 = vector.broadcast %c0_i8 : i8 to vector<1x256xi8>
    %20 = arith.cmpi ne, %18, %19 : vector<1x256xi8>
    %21 = arith.andi %16, %20 : vector<1x256xi1>
    %22 = vector.broadcast %8 : vector<1x256xf32> to vector<32x256xf32>
    %23 = arith.subf %6, %22 : vector<32x256xf32>
    %24 = math.absf %23 : vector<32x256xf32>
    %25 = tpu.iota {dimensions = array<i32: 0>} : vector<32x1xi32>
    %cst = arith.constant dense<0x7F800000> : vector<256xf32>
    %26 = vector.multi_reduction <minimumf>, %24, %cst [0] : vector<32x256xf32> to vector<256xf32>
    %27 = vector.shape_cast %26 : vector<256xf32> to vector<1x256xf32>
    %28 = vector.broadcast %27 : vector<1x256xf32> to vector<32x256xf32>
    %29 = arith.cmpf oeq, %24, %28 : vector<32x256xf32>
    %c32_i32 = arith.constant 32 : i32
    %30 = vector.shape_cast %25 : vector<32x1xi32> to vector<32x1xi32>
    %31 = vector.broadcast %30 : vector<32x1xi32> to vector<32x256xi32>
    %32 = vector.broadcast %c32_i32 : i32 to vector<32x256xi32>
    %33 = arith.select %29, %31, %32 : vector<32x256xi1>, vector<32x256xi32>
    %cst_13 = arith.constant dense<2147483647> : vector<256xi32>
    %34 = vector.multi_reduction <minsi>, %33, %cst_13 [0] : vector<32x256xi32> to vector<256xi32>
    %35 = vector.shape_cast %34 : vector<256xi32> to vector<1x256xi32>
    %36 = vector.broadcast %25 : vector<32x1xi32> to vector<32x256xi32>
    %37 = vector.broadcast %35 : vector<1x256xi32> to vector<32x256xi32>
    %38 = arith.cmpi eq, %36, %37 : vector<32x256xi32>
    %cst_14 = arith.constant 0.000000e+00 : f32
    %39 = vector.broadcast %cst_14 : f32 to vector<32x256xf32>
    %40 = arith.select %38, %4, %39 : vector<32x256xi1>, vector<32x256xf32>
    %cst_15 = arith.constant dense<0.000000e+00> : vector<256xf32>
    %41 = vector.multi_reduction <add>, %40, %cst_15 [0] : vector<32x256xf32> to vector<256xf32>
    %42 = vector.shape_cast %41 : vector<256xf32> to vector<1x256xf32>
    %cst_16 = arith.constant dense<0xFF800000> : vector<256xf32>
    %43 = vector.multi_reduction <maximumf>, %4, %cst_16 [0] : vector<32x256xf32> to vector<256xf32>
    %44 = vector.shape_cast %43 : vector<256xf32> to vector<1x256xf32>
    %45 = vector.broadcast %44 : vector<1x256xf32> to vector<32x256xf32>
    %46 = arith.subf %4, %45 : vector<32x256xf32>
    %47 = math.exp %46 : vector<32x256xf32>
    %cst_17 = arith.constant dense<0.000000e+00> : vector<256xf32>
    %48 = vector.multi_reduction <add>, %47, %cst_17 [0] : vector<32x256xf32> to vector<256xf32>
    %49 = vector.shape_cast %48 : vector<256xf32> to vector<1x256xf32>
    %50 = math.log %49 : vector<1x256xf32>
    %51 = arith.addf %44, %50 : vector<1x256xf32>
    %c0_18 = arith.constant 0 : index
    %c0_19 = arith.constant 0 : index
    %c0_20 = arith.constant 0 : index
    %c0_21 = arith.constant 0 : index
    %52 = vector.load %arg7[%c0_18, %c0_19, %c0_20, %c0_21] : memref<1x1x1x256xf32, #tpu.memory_space<vmem>>, vector<1x1x1x256xf32>
    %53 = vector.shape_cast %52 : vector<1x1x1x256xf32> to vector<1x256xf32>
    %54 = arith.subf %51, %42 : vector<1x256xf32>
    %cst_22 = arith.constant 0.000000e+00 : f32
    %55 = vector.broadcast %cst_22 : f32 to vector<1x256xf32>
    %56 = arith.select %21, %54, %55 : vector<1x256xi1>, vector<1x256xf32>
    %57 = arith.addf %53, %56 : vector<1x256xf32>
    %c0_23 = arith.constant 0 : index
    %c0_24 = arith.constant 0 : index
    %c0_25 = arith.constant 0 : index
    %c0_26 = arith.constant 0 : index
    %58 = vector.load %arg7[%c0_23, %c0_24, %c0_25, %c0_26] : memref<1x1x1x256xf32, #tpu.memory_space<vmem>>, vector<1x1x1x256xf32>
    %59 = vector.shape_cast %58 : vector<1x1x1x256xf32> to vector<1x256xf32>
    %60 = vector.shape_cast %57 : vector<1x256xf32> to vector<1x1x1x256xf32>
    tpu.vector_store %arg7[%c0_23, %c0_24, %c0_25, %c0_26], %60 {strides = array<i32>} : memref<1x1x1x256xf32, #tpu.memory_space<vmem>>, vector<1x1x1x256xf32>,
    %c0_27 = arith.constant 0 : index
    %c0_28 = arith.constant 0 : index
    %c0_29 = arith.constant 0 : index
    %c0_30 = arith.constant 0 : index
    %61 = vector.load %arg8[%c0_27, %c0_28, %c0_29, %c0_30] : memref<1x1x1x256xf32, #tpu.memory_space<vmem>>, vector<1x1x1x256xf32>
    %62 = vector.shape_cast %61 : vector<1x1x1x256xf32> to vector<1x256xf32>
    %63 = arith.extui %21 : vector<1x256xi1> to vector<1x256xi32>
    %64 = arith.sitofp %63 : vector<1x256xi32> to vector<1x256xf32>
    %65 = arith.addf %62, %64 : vector<1x256xf32>
    %c0_31 = arith.constant 0 : index
    %c0_32 = arith.constant 0 : index
    %c0_33 = arith.constant 0 : index
    %c0_34 = arith.constant 0 : index
    %66 = vector.load %arg8[%c0_31, %c0_32, %c0_33, %c0_34] : memref<1x1x1x256xf32, #tpu.memory_space<vmem>>, vector<1x1x1x256xf32>
    %67 = vector.shape_cast %66 : vector<1x1x1x256xf32> to vector<1x256xf32>
    %68 = vector.shape_cast %65 : vector<1x256xf32> to vector<1x1x1x256xf32>
    tpu.vector_store %arg8[%c0_31, %c0_32, %c0_33, %c0_34], %68 {strides = array<i32>} : memref<1x1x1x256xf32, #tpu.memory_space<vmem>>, vector<1x1x1x256xf32>,
    return
  }
  func.func @transform_0(%arg0: i32, %arg1: i32, %arg2: i32) -> (i32, i32, i32) {
    %c1_i32 = arith.constant 1 : i32
    %0 = arith.muli %arg1, %c1_i32 : i32
    %1 = arith.addi %0, %arg2 : i32
    %c0_i32 = arith.constant 0 : i32
    %c0_i32_0 = arith.constant 0 : i32
    return %arg0, %c0_i32, %1 : i32, i32, i32
  }
  func.func @transform_1(%arg0: i32, %arg1: i32, %arg2: i32) -> (i32, i32, i32) {
    %c1_i32 = arith.constant 1 : i32
    %0 = arith.muli %arg1, %c1_i32 : i32
    %1 = arith.addi %0, %arg2 : i32
    %c0_i32 = arith.constant 0 : i32
    %c0_i32_0 = arith.constant 0 : i32
    return %arg0, %c0_i32, %1 : i32, i32, i32
  }
  func.func @transform_2(%arg0: i32, %arg1: i32, %arg2: i32) -> (i32, i32, i32) {
    %c1_i32 = arith.constant 1 : i32
    %0 = arith.muli %arg1, %c1_i32 : i32
    %1 = arith.addi %0, %arg2 : i32
    %c0_i32 = arith.constant 0 : i32
    %c0_i32_0 = arith.constant 0 : i32
    return %arg0, %c0_i32, %1 : i32, i32, i32
  }
  func.func @transform_3(%arg0: i32, %arg1: i32, %arg2: i32) -> (i32, i32, i32) {
    %c1_i32 = arith.constant 1 : i32
    %0 = arith.muli %arg1, %c1_i32 : i32
    %1 = arith.addi %0, %arg2 : i32
    %c0_i32 = arith.constant 0 : i32
    %c0_i32_0 = arith.constant 0 : i32
    return %arg0, %c0_i32, %1 : i32, i32, i32
  }
  func.func @transform_4(%arg0: i32, %arg1: i32, %arg2: i32) -> (i32, i32, i32, i32) {
    %c0_i32 = arith.constant 0 : i32
    %c0_i32_0 = arith.constant 0 : i32
    %c0_i32_1 = arith.constant 0 : i32
    return %arg0, %arg1, %c0_i32, %c0_i32_0 : i32, i32, i32, i32
  }
  func.func @transform_5(%arg0: i32, %arg1: i32, %arg2: i32) -> (i32, i32, i32, i32) {
    %c0_i32 = arith.constant 0 : i32
    %c0_i32_0 = arith.constant 0 : i32
    %c0_i32_1 = arith.constant 0 : i32
    return %arg0, %arg1, %c0_i32, %c0_i32_0 : i32, i32, i32, i32
  }
}

</mosaic_0001>

<llo_original>
// kernel: disparity_classification_loss.1
$region0: #{disparity_classification_loss.1}
  #allocation0 [shape = 'u32[]', space=smem, size = 0x4, offset = 0x4, fixed_abs, tag = 'smem constant byte address 0x4 - core index']
  #allocation1 [shape = 'u32[72,128]{1,0:T(1,128)}', space=vmem, size = 0x9000, scoped, tag = 'internal scratch']
  %s0 = inlined_call_operand.vmem [shape: f32[2,32,256], index: 0, kind: input, shape index: {}]
  %s1 = inlined_call_operand.vmem [shape: f32[2,32,256], index: 1, kind: input, shape index: {}]
  %s2 = inlined_call_operand.vmem [shape: f32[2,1,256], index: 2, kind: input, shape index: {}]
  %s3 = inlined_call_operand.vmem [shape: s8[2,1,256], index: 3, kind: input, shape index: {}]
  %s4 = inlined_call_operand.vmem [shape: f32[2,1,1,256], index: 4, kind: output, shape index: {0}]
  %s5 = inlined_call_operand.vmem [shape: f32[2,1,1,256], index: 5, kind: output, shape index: {1}]
  %6 = xla_tuple %s4, %s5
  %s7 = sld [smem:[#allocation0]]
  $region61: #{disparity_classification_loss.1} parent=0
    _
  %s9 = ssub.s32 1, %s7
  %s10 = scalar_select 0, %s9, %s7
  loop: start=0, step=1, limit=4
  $region2: #{disparity_classification_loss.1} parent=0 // loop_pre_header
    _
  $region3: #{disparity_classification_loss.1} parent=0 // loop_header
    %s12 = sphi 0, %s16
    %p13 = scmp.ge.s32.totalorder %s12, 4
    %s19 = sphi 0, %s38
    %s20 = sphi 0, %s34
    %s21 = sphi 0, %s30
    %s22 = sphi 0, %s19
    %s23 = sphi 0, %s20
    %s24 = sphi 0, %s21
    %s25 = sphi 0, %s22
    %s26 = sphi 0, %s23
    %s27 = sphi 0, %s24
    %s45 = sphi 0, %s47
    %s48 = sphi 0, %s45
    %s49 = sphi 0, %s48
    %s65 = sphi 0, %s49
    %s75 = sphi 0, %s77
    %s78 = sphi 0, %s75
    %s79 = sphi 0, %s78
    %s95 = sphi 0, %s79
    %s105 = sphi 0, %s107
    %s108 = sphi 0, %s105
    %s109 = sphi 0, %s108
    %s125 = sphi 0, %s109
    %s135 = sphi 0, %s137
    %s138 = sphi 0, %s135
    %s139 = sphi 0, %s138
    %s155 = sphi 0, %s139
    %s163 = sphi 0, %s165
    %s166 = sphi 0, %s163
    %s167 = sphi 0, %s166
    %s183 = sphi 0, %s167
    %s191 = sphi 0, %s193
    %s194 = sphi 0, %s191
    %s195 = sphi 0, %s194
    %s211 = sphi 0, %s195
  $region4: #{disparity_classification_loss.1} parent=0 // loop_header_branch
    %15 = sbr.rel (%p13) target = $region8
  $region5: #{disparity_classification_loss.1} parent=0 // loop_body
    %s17 = ssub.s32 %s12, 1
    %s18 = ssub.s32 %s12, 2
    %s28 = sadd.s32 1, %s21
    %p29 = scmp.ge.s32.totalorder %s28, 1
    %s30 = scalar_select %p29, 0, %s28
    %s31 = sadd.s32 1, %s20
    %s32 = scalar_select %p29, %s31, %s20
    %p33 = scmp.ge.s32.totalorder %s32, 1
    %s34 = scalar_select %p33, 0, %s32
    %s35 = sadd.s32 1, %s19
    %s36 = scalar_select %p33, %s35, %s19
    %p37 = scmp.ge.s32.totalorder %s36, 2
    %s38 = scalar_select %p37, 0, %s36
    %s39 = sadd.s32 %s20, %s21
    %s40 = sadd.s32 %s34, %s30
    %s41 = ssub.s32 %s19, %s38
    %s42 = ssub.s32 %s39, %s40
    %s43 = sor.u32 %s41, %s42
    %p44 = scmp.eq.s32.totalorder %s43, 0
    %s46 = sadd.s32 %s45, 1
    %s47 = scalar_select %p44, %s45, %s46
    %p50 = pneg %p44
    %p51 = scmp.eq.s32.totalorder %s12, 1
    %p52 = por %p50, %p51
    %p53 = scmp.ne.s32.totalorder %s45, %s48
    %p54 = scmp.eq.s32.totalorder %s12, 0
    %p55 = por %p53, %p54
    %p56 = scmp.ne.s32.totalorder %s45, %s48
    %p57 = scmp.eq.s32.totalorder %s17, 1
    %p58 = por %p56, %p57
    %p59 = scmp.ne.s32.totalorder %s48, %s49
    %p60 = scmp.eq.s32.totalorder %s17, 0
    %p61 = por %p59, %p60
    %p62 = scmp.ne.s32.totalorder %s48, %s49
    %p63 = scmp.eq.s32.totalorder %s18, 1
    %p64 = por %p62, %p63
    %p66 = scmp.ne.s32.totalorder %s49, %s65
    %p67 = scmp.eq.s32.totalorder %s18, 0
    %p68 = por %p66, %p67
    %s69 = sadd.s32 %s20, %s21
    %s70 = sadd.s32 %s34, %s30
    %s71 = ssub.s32 %s19, %s38
    %s72 = ssub.s32 %s69, %s70
    %s73 = sor.u32 %s71, %s72
    %p74 = scmp.eq.s32.totalorder %s73, 0
    %s76 = sadd.s32 %s75, 1
    %s77 = scalar_select %p74, %s75, %s76
    %p80 = pneg %p74
    %p81 = scmp.eq.s32.totalorder %s12, 1
    %p82 = por %p80, %p81
    %p83 = scmp.ne.s32.totalorder %s75, %s78
    %p84 = scmp.eq.s32.totalorder %s12, 0
    %p85 = por %p83, %p84
    %p86 = scmp.ne.s32.totalorder %s75, %s78
    %p87 = scmp.eq.s32.totalorder %s17, 1
    %p88 = por %p86, %p87
    %p89 = scmp.ne.s32.totalorder %s78, %s79
    %p90 = scmp.eq.s32.totalorder %s17, 0
    %p91 = por %p89, %p90
    %p92 = scmp.ne.s32.totalorder %s78, %s79
    %p93 = scmp.eq.s32.totalorder %s18, 1
    %p94 = por %p92, %p93
    %p96 = scmp.ne.s32.totalorder %s79, %s95
    %p97 = scmp.eq.s32.totalorder %s18, 0
    %p98 = por %p96, %p97
    %s99 = sadd.s32 %s20, %s21
    %s100 = sadd.s32 %s34, %s30
    %s101 = ssub.s32 %s19, %s38
    %s102 = ssub.s32 %s99, %s100
    %s103 = sor.u32 %s101, %s102
    %p104 = scmp.eq.s32.totalorder %s103, 0
    %s106 = sadd.s32 %s105, 1
    %s107 = scalar_select %p104, %s105, %s106
    %p110 = pneg %p104
    %p111 = scmp.eq.s32.totalorder %s12, 1
    %p112 = por %p110, %p111
    %p113 = scmp.ne.s32.totalorder %s105, %s108
    %p114 = scmp.eq.s32.totalorder %s12, 0
    %p115 = por %p113, %p114
    %p116 = scmp.ne.s32.totalorder %s105, %s108
    %p117 = scmp.eq.s32.totalorder %s17, 1
    %p118 = por %p116, %p117
    %p119 = scmp.ne.s32.totalorder %s108, %s109
    %p120 = scmp.eq.s32.totalorder %s17, 0
    %p121 = por %p119, %p120
    %p122 = scmp.ne.s32.totalorder %s108, %s109
    %p123 = scmp.eq.s32.totalorder %s18, 1
    %p124 = por %p122, %p123
    %p126 = scmp.ne.s32.totalorder %s109, %s125
    %p127 = scmp.eq.s32.totalorder %s18, 0
    %p128 = por %p126, %p127
    %s129 = sadd.s32 %s20, %s21
    %s130 = sadd.s32 %s34, %s30
    %s131 = ssub.s32 %s19, %s38
    %s132 = ssub.s32 %s129, %s130
    %s133 = sor.u32 %s131, %s132
    %p134 = scmp.eq.s32.totalorder %s133, 0
    %s136 = sadd.s32 %s135, 1
    %s137 = scalar_select %p134, %s135, %s136
    %p140 = pneg %p134
    %p141 = scmp.eq.s32.totalorder %s12, 1
    %p142 = por %p140, %p141
    %p143 = scmp.ne.s32.totalorder %s135, %s138
    %p144 = scmp.eq.s32.totalorder %s12, 0
    %p145 = por %p143, %p144
    %p146 = scmp.ne.s32.totalorder %s135, %s138
    %p147 = scmp.eq.s32.totalorder %s17, 1
    %p148 = por %p146, %p147
    %p149 = scmp.ne.s32.totalorder %s138, %s139
    %p150 = scmp.eq.s32.totalorder %s17, 0
    %p151 = por %p149, %p150
    %p152 = scmp.ne.s32.totalorder %s138, %s139
    %p153 = scmp.eq.s32.totalorder %s18, 1
    %p154 = por %p152, %p153
    %p156 = scmp.ne.s32.totalorder %s139, %s155
    %p157 = scmp.eq.s32.totalorder %s18, 0
    %p158 = por %p156, %p157
    %s159 = ssub.s32 %s19, %s38
    %s160 = ssub.s32 %s20, %s34
    %s161 = sor.u32 %s159, %s160
    %p162 = scmp.eq.s32.totalorder %s161, 0
    %s164 = sadd.s32 %s163, 1
    %s165 = scalar_select %p162, %s163, %s164
    %p168 = pneg %p162
    %p169 = scmp.eq.s32.totalorder %s12, 1
    %p170 = por %p168, %p169
    %p171 = scmp.ne.s32.totalorder %s163, %s166
    %p172 = scmp.eq.s32.totalorder %s12, 0
    %p173 = por %p171, %p172
    %p174 = scmp.ne.s32.totalorder %s163, %s166
    %p175 = scmp.eq.s32.totalorder %s17, 1
    %p176 = por %p174, %p175
    %p177 = scmp.ne.s32.totalorder %s166, %s167
    %p178 = scmp.eq.s32.totalorder %s17, 0
    %p179 = por %p177, %p178
    %p180 = scmp.ne.s32.totalorder %s166, %s167
    %p181 = scmp.eq.s32.totalorder %s18, 1
    %p182 = por %p180, %p181
    %p184 = scmp.ne.s32.totalorder %s167, %s183
    %p185 = scmp.eq.s32.totalorder %s18, 0
    %p186 = por %p184, %p185
    %s187 = ssub.s32 %s19, %s38
    %s188 = ssub.s32 %s20, %s34
    %s189 = sor.u32 %s187, %s188
    %p190 = scmp.eq.s32.totalorder %s189, 0
    %s192 = sadd.s32 %s191, 1
    %s193 = scalar_select %p190, %s191, %s192
    %p196 = pneg %p190
    %p197 = scmp.eq.s32.totalorder %s12, 1
    %p198 = por %p196, %p197
    %p199 = scmp.ne.s32.totalorder %s191, %s194
    %p200 = scmp.eq.s32.totalorder %s12, 0
    %p201 = por %p199, %p200
    %p202 = scmp.ne.s32.totalorder %s191, %s194
    %p203 = scmp.eq.s32.totalorder %s17, 1
    %p204 = por %p202, %p203
    %p205 = scmp.ne.s32.totalorder %s194, %s195
    %p206 = scmp.eq.s32.totalorder %s17, 0
    %p207 = por %p205, %p206
    %p208 = scmp.ne.s32.totalorder %s194, %s195
    %p209 = scmp.eq.s32.totalorder %s18, 1
    %p210 = por %p208, %p209
    %p212 = scmp.ne.s32.totalorder %s195, %s211
    %p213 = scmp.eq.s32.totalorder %s18, 0
    %p214 = por %p212, %p213
    %p215 = scmp.le.s32.totalorder 1, %s12
    %p216 = scmp.lt.s32.totalorder %s12, 3
    %p217 = pnand %p215, %p216
    %p218 = pneg %p217
    // Predicated region
    $region9: #{disparity_classification_loss.1} parent=5 // pred_check
      _
    $region10: #{disparity_classification_loss.1} parent=5 // pred_check_branch
      %220 = sbr.rel (%p217) target = $region12
    $region11: #{disparity_classification_loss.1} parent=5 // pred_region
      %s221 = ssub.s32 %s12, 1
    $region12: #{disparity_classification_loss.1} parent=5 // pred_fallthru
      _
    %p222 = scmp.lt.s32.totalorder %s12, 2
    // Predicated region
    $region13: #{disparity_classification_loss.1} parent=5 // pred_check
      %p223 = pneg %p222
    $region14: #{disparity_classification_loss.1} parent=5 // pred_check_branch
      %225 = sbr.rel (%p223) target = $region16
    $region15: #{disparity_classification_loss.1} parent=5 // pred_region
      // Predicated region
      $region17: #{disparity_classification_loss.1} parent=15 // pred_check
        %p226 = pneg %p55
      $region18: #{disparity_classification_loss.1} parent=15 // pred_check_branch
        %228 = sbr.rel (%p226) target = $region20
      $region19: #{disparity_classification_loss.1} parent=15 // pred_region
        %s229 = sadd.s32 %s20, %s21
        %s230 = smul.u32 2, %s229
        %p231 = scmp.lt.s32.totalorder %s19, 1
        %s232 = scalar_select %p231, %s19, 1
        %p233 = scmp.lt.s32.totalorder %s230, 1
        %s234 = scalar_select %p233, %s230, 1
        %s235 = smul.addr %s232, 8
        %s236 = sadd.s32 %s234, %s235
        %s237 = smul.addr %s236, 8
        %s238 = scalar_lea.vmem %s0, %s237
        %s239 = sadd.s32 %s20, %s21
        %s240 = smul.u32 2, %s239
      $region20: #{disparity_classification_loss.1} parent=15 // pred_fallthru
        _
      // Predicated region
      $region21: #{disparity_classification_loss.1} parent=15 // pred_check
        %p241 = pneg %p85
      $region22: #{disparity_classification_loss.1} parent=15 // pred_check_branch
        %243 = sbr.rel (%p241) target = $region24
      $region23: #{disparity_classification_loss.1} parent=15 // pred_region
        %s244 = sadd.s32 %s20, %s21
        %s245 = smul.u32 2, %s244
        %p246 = scmp.lt.s32.totalorder %s19, 1
        %s247 = scalar_select %p246, %s19, 1
        %p248 = scmp.lt.s32.totalorder %s245, 1
        %s249 = scalar_select %p248, %s245, 1
        %s250 = smul.addr %s247, 8
        %s251 = sadd.s32 %s249, %s250
        %s252 = smul.addr %s251, 8
        %s253 = scalar_lea.vmem %s1, %s252
        %s254 = sadd.s32 %s20, %s21
        %s255 = smul.u32 2, %s254
      $region24: #{disparity_classification_loss.1} parent=15 // pred_fallthru
        _
      // Predicated region
      $region25: #{disparity_classification_loss.1} parent=15 // pred_check
        %p256 = pneg %p115
      $region26: #{disparity_classification_loss.1} parent=15 // pred_check_branch
        %258 = sbr.rel (%p256) target = $region28
      $region27: #{disparity_classification_loss.1} parent=15 // pred_region
        %s259 = sadd.s32 %s20, %s21
        %s260 = smul.u32 2, %s259
        %p261 = scmp.lt.s32.totalorder %s19, 1
        %s262 = scalar_select %p261, %s19, 1
        %p263 = scmp.lt.s32.totalorder %s260, 1
        %s264 = scalar_select %p263, %s260, 1
        %s265 = smul.addr %s262, 2
        %s266 = sadd.s32 %s264, %s265
        %s267 = scalar_lea.vmem %s2, %s266
        %s268 = sadd.s32 %s20, %s21
        %s269 = smul.u32 2, %s268
      $region28: #{disparity_classification_loss.1} parent=15 // pred_fallthru
        _
      // Predicated region
      $region29: #{disparity_classification_loss.1} parent=15 // pred_check
        %p270 = pneg %p145
      $region30: #{disparity_classification_loss.1} parent=15 // pred_check_branch
        %272 = sbr.rel (%p270) target = $region32
      $region31: #{disparity_classification_loss.1} parent=15 // pred_region
        %s273 = sadd.s32 %s20, %s21
        %s274 = smul.u32 2, %s273
        %p275 = scmp.lt.s32.totalorder %s19, 1
        %s276 = scalar_select %p275, %s19, 1
        %p277 = scmp.lt.s32.totalorder %s274, 1
        %s278 = scalar_select %p277, %s274, 1
        %s279 = smul.addr %s276, 2
        %s280 = sadd.s32 %s278, %s279
        %s281 = scalar_lea.vmem %s3, %s280
        %s282 = sadd.s32 %s20, %s21
        %s283 = smul.u32 2, %s282
      $region32: #{disparity_classification_loss.1} parent=15 // pred_fallthru
        _
    $region16: #{disparity_classification_loss.1} parent=5 // pred_fallthru
      _
    %p284 = scmp.le.s32.totalorder 1, %s12
    %p285 = scmp.lt.s32.totalorder %s12, 3
    %p286 = pnand %p284, %p285
    %p287 = pneg %p286
    // Predicated region
    $region33: #{disparity_classification_loss.1} parent=5 // pred_check
      _
    $region34: #{disparity_classification_loss.1} parent=5 // pred_check_branch
      %289 = sbr.rel (%p286) target = $region36
    $region35: #{disparity_classification_loss.1} parent=5 // pred_region
      %s290 = ssub.s32 %s12, 1
      %s291 = sadd.s32 %s23, %s24
      %s292 = smul.u32 2, %s291
      %p293 = scmp.lt.s32.totalorder %s22, 1
      %s294 = scalar_select %p293, %s22, 1
      %p295 = scmp.lt.s32.totalorder %s292, 1
      %s296 = scalar_select %p295, %s292, 1
      %s297 = smul.addr %s294, 8
      %s298 = sadd.s32 %s296, %s297
      %s299 = smul.addr %s298, 8
      %s300 = scalar_lea.vmem %s0, %s299
      %p301 = pneg %p61
      %p302 = pneg %p58
      %s303 = sadd.s32 %s23, %s24
      %s304 = smul.u32 2, %s303
      %p305 = scmp.lt.s32.totalorder %s22, 1
      %s306 = scalar_select %p305, %s22, 1
      %p307 = scmp.lt.s32.totalorder %s304, 1
      %s308 = scalar_select %p307, %s304, 1
      %s309 = smul.addr %s306, 8
      %s310 = sadd.s32 %s308, %s309
      %s311 = smul.addr %s310, 8
      %s312 = scalar_lea.vmem %s1, %s311
      %p313 = pneg %p91
      %p314 = pneg %p88
      %s315 = sadd.s32 %s23, %s24
      %s316 = smul.u32 2, %s315
      %p317 = scmp.lt.s32.totalorder %s22, 1
      %s318 = scalar_select %p317, %s22, 1
      %p319 = scmp.lt.s32.totalorder %s316, 1
      %s320 = scalar_select %p319, %s316, 1
      %s321 = smul.addr %s318, 2
      %s322 = sadd.s32 %s320, %s321
      %s323 = scalar_lea.vmem %s2, %s322
      %p324 = pneg %p121
      %p325 = pneg %p118
      %s326 = sadd.s32 %s23, %s24
      %s327 = smul.u32 2, %s326
      %p328 = scmp.lt.s32.totalorder %s22, 1
      %s329 = scalar_select %p328, %s22, 1
      %p330 = scmp.lt.s32.totalorder %s327, 1
      %s331 = scalar_select %p330, %s327, 1
      %s332 = smul.addr %s329, 2
      %s333 = sadd.s32 %s331, %s332
      %s334 = scalar_lea.vmem %s3, %s333
      %p335 = pneg %p151
      %p336 = pneg %p148
      %p337 = pneg %p179
      %p338 = pneg %p176
      %p339 = scmp.lt.s32.totalorder %s22, 1
      %s340 = scalar_select %p339, %s22, 1
      %p341 = scmp.lt.s32.totalorder %s23, 0
      %s342 = scalar_select %p341, %s23, 0
      %s343 = smul.addr %s342, 2
      %s344 = smul.addr %s340, 2
      %s345 = sadd.s32 %s343, %s344
      %s346 = scalar_lea.vmem %s4, %s345
      %p347 = pneg %p207
      %p348 = pneg %p204
      %p349 = scmp.lt.s32.totalorder %s22, 1
      %s350 = scalar_select %p349, %s22, 1
      %p351 = scmp.lt.s32.totalorder %s23, 0
      %s352 = scalar_select %p351, %s23, 0
      %s353 = smul.addr %s352, 2
      %s354 = smul.addr %s350, 2
      %s355 = sadd.s32 %s353, %s354
      %s356 = scalar_lea.vmem %s5, %s355
      %s357 = sadd.s32 %s23, %s24
      %s358 = smul.u32 2, %s357
      %p359 = scmp.lt.s32.totalorder %s22, 1
      %s360 = scalar_select %p359, %s22, 1
      %p361 = scmp.lt.s32.totalorder %s358, 1
      %s362 = scalar_select %p361, %s358, 1
      %s363 = smul.addr %s360, 8
      %s364 = sadd.s32 %s362, %s363
      %s365 = smul.addr %s364, 8
      %s366 = scalar_lea.vmem %s0, %s365
      %s367 = sadd.s32 %s23, %s24
      %s368 = smul.u32 2, %s367
      %s369 = sadd.s32 %s23, %s24
      %s370 = smul.u32 2, %s369
      %p371 = scmp.lt.s32.totalorder %s22, 1
      %s372 = scalar_select %p371, %s22, 1
      %p373 = scmp.lt.s32.totalorder %s370, 1
      %s374 = scalar_select %p373, %s370, 1
      %s375 = smul.addr %s372, 8
      %s376 = sadd.s32 %s374, %s375
      %s377 = smul.addr %s376, 8
      %s378 = scalar_lea.vmem %s1, %s377
      %s379 = sadd.s32 %s23, %s24
      %s380 = smul.u32 2, %s379
      %s381 = sadd.s32 %s23, %s24
      %s382 = smul.u32 2, %s381
      %p383 = scmp.lt.s32.totalorder %s22, 1
      %s384 = scalar_select %p383, %s22, 1
      %p385 = scmp.lt.s32.totalorder %s382, 1
      %s386 = scalar_select %p385, %s382, 1
      %s387 = smul.addr %s384, 2
      %s388 = sadd.s32 %s386, %s387
      %s389 = scalar_lea.vmem %s2, %s388
      %s390 = sadd.s32 %s23, %s24
      %s391 = smul.u32 2, %s390
      %s392 = sadd.s32 %s23, %s24
      %s393 = smul.u32 2, %s392
      %p394 = scmp.lt.s32.totalorder %s22, 1
      %s395 = scalar_select %p394, %s22, 1
      %p396 = scmp.lt.s32.totalorder %s393, 1
      %s397 = scalar_select %p396, %s393, 1
      %s398 = smul.addr %s395, 2
      %s399 = sadd.s32 %s397, %s398
      %s400 = scalar_lea.vmem %s3, %s399
      %s401 = sadd.s32 %s23, %s24
      %s402 = smul.u32 2, %s401
      %p403 = scmp.lt.s32.totalorder %s22, 1
      %s404 = scalar_select %p403, %s22, 1
      %p405 = scmp.lt.s32.totalorder %s23, 0
      %s406 = scalar_select %p405, %s23, 0
      %s407 = smul.addr %s406, 2
      %s408 = smul.addr %s404, 2
      %s409 = sadd.s32 %s407, %s408
      %s410 = scalar_lea.vmem %s4, %s409
      %p411 = scmp.lt.s32.totalorder %s22, 1
      %s412 = scalar_select %p411, %s22, 1
      %p413 = scmp.lt.s32.totalorder %s23, 0
      %s414 = scalar_select %p413, %s23, 0
      %s415 = smul.addr %s414, 2
      %s416 = smul.addr %s412, 2
      %s417 = sadd.s32 %s415, %s416
      %s418 = scalar_lea.vmem %s5, %s417
      %p421 = scmp.eq.s32.totalorder %s24, 0
      // Predicated region
      $region37: #{disparity_classification_loss.1} parent=35 // pred_check
        %p422 = pneg %p421
      $region38: #{disparity_classification_loss.1} parent=35 // pred_check_branch
        %424 = sbr.rel (%p422) target = $region40
      $region39: #{disparity_classification_loss.1} parent=35 // pred_region
        %v425 = vlaneseq
        %vm426 = vcmp.ge.s32.totalorder %v425, 0
        %vm427 = vcmp.lt.s32.totalorder %v425, 256
        %vm428 = vmand %vm426, %vm427
        %429 = vst.msk [vmem:[%s410] sm:$0x3] %vm428, 0.0
        %430 = vst.msk [vmem:[%s418] sm:$0x3] %vm428, 0.0
      $region40: #{disparity_classification_loss.1} parent=35 // pred_fallthru
        _
      %v431 = vld [vmem:[%s366] sm:$0xff]
      %v432 = vld [vmem:[%s366 + $0x8] sm:$0xff]
      %v433 = vld [vmem:[%s366 + $0x10] sm:$0xff]
      %v434 = vld [vmem:[%s366 + $0x18] sm:$0xff]
      %v435 = vld [vmem:[%s366 + $0x20] sm:$0xff]
      %v436 = vld [vmem:[%s366 + $0x28] sm:$0xff]
      %v437 = vld [vmem:[%s366 + $0x30] sm:$0xff]
      %v438 = vld [vmem:[%s366 + $0x38] sm:$0xff]
      %v439 = vld [vmem:[%s378] sm:$0xff]
      %v440 = vld [vmem:[%s378 + $0x8] sm:$0xff]
      %v441 = vld [vmem:[%s378 + $0x10] sm:$0xff]
      %v442 = vld [vmem:[%s378 + $0x18] sm:$0xff]
      %v443 = vld [vmem:[%s378 + $0x20] sm:$0xff]
      %v444 = vld [vmem:[%s378 + $0x28] sm:$0xff]
      %v445 = vld [vmem:[%s378 + $0x30] sm:$0xff]
      %v446 = vld [vmem:[%s378 + $0x38] sm:$0xff]
      %v447 = vld [vmem:[%s389] sm:$0x3]
      %v448 = vlaneseq
      %v449 = vand.u32 %v448, 127
      %v450 = vadd.s32 %v449, 128
      %s451 = sadd.s32 %s23, %s24
      %s452 = smul.u32 %s451, 256
      %v453 = vstv %s452
      %v454 = vadd.s32 %v453, %v449
      %v455 = vadd.s32 %v453, %v450
      %vm456 = vcmp.lt.s32.totalorder %v454, 256
      %vm457 = vcmp.lt.s32.totalorder %v455, 256
      %v458 = vld [vmem:[%s400] sm:$0x3]
      %vm459 = vnez %v458
      %v460 = vsel %vm459, 16843009, 0
      %v461 = vunpack.c.0.s8 %v460
      %vm462 = vcmp.ne.s32.totalorder %v461, 0
      %v463 = vsel %vm462, 1, 0
      %v464 = vperm.slane %v463, 0
      %v465 = vperm.slane %v463, 4
      %vm466 = vcmp.ne.s32.totalorder %v464, 0
      %vm467 = vcmp.ne.s32.totalorder %v465, 0
      %vm468 = vmand %vm456, %vm466
      %vm469 = vmand %vm457, %vm467
      %v471 = vperm.slane %v447, 0
      %v472 = vperm.slane %v447, 1
      %v475 = vsub.f32 %v439, %v471
      %v476 = vsub.f32 %v440, %v472
      %v477 = vsub.f32 %v441, %v471
      %v478 = vsub.f32 %v442, %v472
      %v479 = vsub.f32 %v443, %v471
      %v480 = vsub.f32 %v444, %v472
      %v481 = vsub.f32 %v445, %v471
      %v482 = vsub.f32 %v446, %v472
      %v483 = vand.u32 2147483647, %v475
      %v484 = vand.u32 2147483647, %v476
      %v485 = vand.u32 2147483647, %v477
      %v486 = vand.u32 2147483647, %v478
      %v487 = vand.u32 2147483647, %v479
      %v488 = vand.u32 2147483647, %v480
      %v489 = vand.u32 2147483647, %v481
      %v490 = vand.u32 2147483647, %v482
      %v491 = vlaneseq
      %v492 = vshrl.u32 %v491, 7
      %v493 = vadd.s32 %v492, 8
      %v494 = vadd.s32 %v492, 16
      %v495 = vadd.s32 %v492, 24
      %v496 = vmin.f32 %v483, %v487
      %v497 = vmin.f32 %v485, %v489
      %v498 = vmin.f32 %v496, %v497
      %v499 = vrot.slane %v498, 4
      %v500 = vmin.f32 %v498, %v499
      %v501 = vrot.slane %v500, 2
      %v502 = vmin.f32 %v500, %v501
      %v503 = vrot.slane %v502, 1
      %v504 = vmin.f32 %v502, %v503
      %v505 = vmin.f32 %v484, %v488
      %v506 = vmin.f32 %v486, %v490
      %v507 = vmin.f32 %v505, %v506
      %v508 = vrot.slane %v507, 4
      %v509 = vmin.f32 %v507, %v508
      %v510 = vrot.slane %v509, 2
      %v511 = vmin.f32 %v509, %v510
      %v512 = vrot.slane %v511, 1
      %v513 = vmin.f32 %v511, %v512
      %vm514 = vcmp.eq.f32.partialorder %v483, %v504
      %vm515 = vcmp.eq.f32.partialorder %v484, %v513
      %vm516 = vcmp.eq.f32.partialorder %v485, %v504
      %vm517 = vcmp.eq.f32.partialorder %v486, %v513
      %vm518 = vcmp.eq.f32.partialorder %v487, %v504
      %vm519 = vcmp.eq.f32.partialorder %v488, %v513
      %vm520 = vcmp.eq.f32.partialorder %v489, %v504
      %vm521 = vcmp.eq.f32.partialorder %v490, %v513
      %v522 = vsel %vm514, %v492, 32
      %v523 = vsel %vm515, %v492, 32
      %v524 = vsel %vm516, %v493, 32
      %v525 = vsel %vm517, %v493, 32
      %v526 = vsel %vm518, %v494, 32
      %v527 = vsel %vm519, %v494, 32
      %v528 = vsel %vm520, %v495, 32
      %v529 = vsel %vm521, %v495, 32
      %vm530 = vcmp.lt.s32.totalorder %v522, %v526
      %v531 = vsel %vm530, %v522, %v526
      %vm532 = vcmp.lt.s32.totalorder %v524, %v528
      %v533 = vsel %vm532, %v524, %v528
      %vm534 = vcmp.lt.s32.totalorder %v531, %v533
      %v535 = vsel %vm534, %v531, %v533
      %v536 = vrot.slane %v535, 4
      %vm537 = vcmp.lt.s32.totalorder %v535, %v536
      %v538 = vsel %vm537, %v535, %v536
      %v539 = vrot.slane %v538, 2
      %vm540 = vcmp.lt.s32.totalorder %v538, %v539
      %v541 = vsel %vm540, %v538, %v539
      %v542 = vrot.slane %v541, 1
      %vm543 = vcmp.lt.s32.totalorder %v541, %v542
      %v544 = vsel %vm543, %v541, %v542
      %vm545 = vcmp.lt.s32.totalorder %v523, %v527
      %v546 = vsel %vm545, %v523, %v527
      %vm547 = vcmp.lt.s32.totalorder %v525, %v529
      %v548 = vsel %vm547, %v525, %v529
      %vm549 = vcmp.lt.s32.totalorder %v546, %v548
      %v550 = vsel %vm549, %v546, %v548
      %v551 = vrot.slane %v550, 4
      %vm552 = vcmp.lt.s32.totalorder %v550, %v551
      %v553 = vsel %vm552, %v550, %v551
      %v554 = vrot.slane %v553, 2
      %vm555 = vcmp.lt.s32.totalorder %v553, %v554
      %v556 = vsel %vm555, %v553, %v554
      %v557 = vrot.slane %v556, 1
      %vm558 = vcmp.lt.s32.totalorder %v556, %v557
      %v559 = vsel %vm558, %v556, %v557
      %vm560 = vcmp.eq.s32.totalorder %v492, %v544
      %vm561 = vcmp.eq.s32.totalorder %v492, %v559
      %vm562 = vcmp.eq.s32.totalorder %v493, %v544
      %vm563 = vcmp.eq.s32.totalorder %v493, %v559
      %vm564 = vcmp.eq.s32.totalorder %v494, %v544
      %vm565 = vcmp.eq.s32.totalorder %v494, %v559
      %vm566 = vcmp.eq.s32.totalorder %v495, %v544
      %vm567 = vcmp.eq.s32.totalorder %v495, %v559
      %v568 = vsel %vm560, %v431, 0.0
      %v569 = vsel %vm561, %v432, 0.0
      %v570 = vsel %vm562, %v433, 0.0
      %v571 = vsel %vm563, %v434, 0.0
      %v572 = vsel %vm564, %v435, 0.0
      %v573 = vsel %vm565, %v436, 0.0
      %v574 = vsel %vm566, %v437, 0.0
      %v575 = vsel %vm567, %v438, 0.0
      %v576 = vadd.f32 %v568, %v570
      %v577 = vadd.f32 %v576, %v572
      %v578 = vadd.f32 %v577, %v574
      %v579 = vrot.slane %v578, 4
      %v580 = vadd.f32 %v578, %v579
      %v581 = vrot.slane %v580, 2
      %v582 = vadd.f32 %v580, %v581
      %v583 = vrot.slane %v582, 1
      %v584 = vadd.f32 %v582, %v583
      %v585 = vadd.f32 %v569, %v571
      %v586 = vadd.f32 %v585, %v573
      %v587 = vadd.f32 %v586, %v575
      %v588 = vrot.slane %v587, 4
      %v589 = vadd.f32 %v587, %v588
      %v590 = vrot.slane %v589, 2
      %v591 = vadd.f32 %v589, %v590
      %v592 = vrot.slane %v591, 1
      %v593 = vadd.f32 %v591, %v592
      %v594 = vmax.f32 %v431, %v435
      %v595 = vmax.f32 %v433, %v437
      %v596 = vmax.f32 %v594, %v595
      %v597 = vrot.slane %v596, 4
      %v598 = vmax.f32 %v596, %v597
      %v599 = vrot.slane %v598, 2
      %v600 = vmax.f32 %v598, %v599
      %v601 = vrot.slane %v600, 1
      %v602 = vmax.f32 %v600, %v601
      %v603 = vmax.f32 %v432, %v436
      %v604 = vmax.f32 %v434, %v438
      %v605 = vmax.f32 %v603, %v604
      %v606 = vrot.slane %v605, 4
      %v607 = vmax.f32 %v605, %v606
      %v608 = vrot.slane %v607, 2
      %v609 = vmax.f32 %v607, %v608
      %v610 = vrot.slane %v609, 1
      %v611 = vmax.f32 %v609, %v610
      %v612 = vsub.f32 %v431, %v602
      %v613 = vsub.f32 %v432, %v611
      %v614 = vsub.f32 %v433, %v602
      %v615 = vsub.f32 %v434, %v611
      %v616 = vsub.f32 %v435, %v602
      %v617 = vsub.f32 %v436, %v611
      %v618 = vsub.f32 %v437, %v602
      %v619 = vsub.f32 %v438, %v611
      %v620 = vmul.f32 %v612, 1.442695
      %v621 = vpow.pop %v620
      %v622 = vmul.f32 %v613, 1.442695
      %v623 = vpow.pop %v622
      %v624 = vmul.f32 %v614, 1.442695
      %v625 = vpow.pop %v624
      %v626 = vmul.f32 %v615, 1.442695
      %v627 = vpow.pop %v626
      %v628 = vmul.f32 %v616, 1.442695
      %v629 = vpow.pop %v628
      %v630 = vmul.f32 %v617, 1.442695
      %v631 = vpow.pop %v630
      %v632 = vmul.f32 %v618, 1.442695
      %v633 = vpow.pop %v632
      %v634 = vmul.f32 %v619, 1.442695
      %v635 = vpow.pop %v634
      %v636 = vadd.f32 %v621, %v625
      %v637 = vadd.f32 %v636, %v629
      %v638 = vadd.f32 %v637, %v633
      %v639 = vrot.slane %v638, 4
      %v640 = vadd.f32 %v638, %v639
      %v641 = vrot.slane %v640, 2
      %v642 = vadd.f32 %v640, %v641
      %v643 = vrot.slane %v642, 1
      %v644 = vadd.f32 %v642, %v643
      %v645 = vadd.f32 %v623, %v627
      %v646 = vadd.f32 %v645, %v631
      %v647 = vadd.f32 %v646, %v635
      %v648 = vrot.slane %v647, 4
      %v649 = vadd.f32 %v647, %v648
      %v650 = vrot.slane %v649, 2
      %v651 = vadd.f32 %v649, %v650
      %v652 = vrot.slane %v651, 1
      %v653 = vadd.f32 %v651, %v652
      %v654 = vlog2.pop %v644
      %v655 = vmul.f32 %v654, 0.6931472
      %v656 = vlog2.pop %v653
      %v657 = vmul.f32 %v656, 0.6931472
      %v658 = vadd.f32 %v602, %v655
      %v659 = vadd.f32 %v611, %v657
      %v660 = vld [vmem:[%s410] sm:$0x3]
      %v661 = vsub.f32 %v658, %v584
      %v662 = vsub.f32 %v659, %v593
      %v663 = vsel %vm468, %v661, 0.0
      %v664 = vsel %vm469, %v662, 0.0
      %v667 = vrot.slane %v664, 7
      %vm668 = vcmask 1040384
      %v669 = vsel %vm668, %v663, %v667
      %v671 = vadd.f32 %v660, %v669
      %v672 = vlaneseq
      %vm673 = vcmp.ge.s32.totalorder %v672, 0
      %vm674 = vcmp.lt.s32.totalorder %v672, 256
      %vm675 = vmand %vm673, %vm674
      %676 = vst.msk [vmem:[%s410] sm:$0x3] %vm675, %v671
      %v677 = vld [vmem:[%s418] sm:$0x3]
      %v678 = vsel %vm468, 1, 0
      %v679 = vsel %vm469, 1, 0
      %v680 = vcvt.s32.f32 %v678
      %v681 = vcvt.s32.f32 %v679
      %v684 = vrot.slane %v681, 7
      %v685 = vsel %vm668, %v680, %v684
      %v687 = vadd.f32 %v677, %v685
      %688 = vst.msk [vmem:[%s418] sm:$0x3] %vm675, %v687
      %p689 = scmp.lt.s32.totalorder %s22, 1
      %s690 = scalar_select %p689, %s22, 1
      %p691 = scmp.lt.s32.totalorder %s23, 0
      %s692 = scalar_select %p691, %s23, 0
      %s693 = smul.addr %s692, 2
      %s694 = smul.addr %s690, 2
      %s695 = sadd.s32 %s693, %s694
      %s696 = scalar_lea.vmem %s4, %s695
      %p697 = scmp.lt.s32.totalorder %s22, 1
      %s698 = scalar_select %p697, %s22, 1
      %p699 = scmp.lt.s32.totalorder %s23, 0
      %s700 = scalar_select %p699, %s23, 0
      %s701 = smul.addr %s700, 2
      %s702 = smul.addr %s698, 2
      %s703 = sadd.s32 %s701, %s702
      %s704 = scalar_lea.vmem %s5, %s703
      // Predicated region
      $region41: #{disparity_classification_loss.1} parent=35 // pred_check
        %p705 = pneg %p176
      $region42: #{disparity_classification_loss.1} parent=35 // pred_check_branch
        %707 = sbr.rel (%p705) target = $region44
      $region43: #{disparity_classification_loss.1} parent=35 // pred_region
        _
      $region44: #{disparity_classification_loss.1} parent=35 // pred_fallthru
        _
      // Predicated region
      $region45: #{disparity_classification_loss.1} parent=35 // pred_check
        %p708 = pneg %p204
      $region46: #{disparity_classification_loss.1} parent=35 // pred_check_branch
        %710 = sbr.rel (%p708) target = $region48
      $region47: #{disparity_classification_loss.1} parent=35 // pred_region
        _
      $region48: #{disparity_classification_loss.1} parent=35 // pred_fallthru
        _
    $region36: #{disparity_classification_loss.1} parent=5 // pred_fallthru
      _
    %p711 = scmp.le.s32.totalorder 2, %s12
    // Predicated region
    $region49: #{disparity_classification_loss.1} parent=5 // pred_check
      %p712 = pneg %p711
    $region50: #{disparity_classification_loss.1} parent=5 // pred_check_branch
      %714 = sbr.rel (%p712) target = $region52
    $region51: #{disparity_classification_loss.1} parent=5 // pred_region
      %s715 = ssub.s32 %s12, 2
      // Predicated region
      $region53: #{disparity_classification_loss.1} parent=51 // pred_check
        %p716 = pneg %p182
      $region54: #{disparity_classification_loss.1} parent=51 // pred_check_branch
        %718 = sbr.rel (%p716) target = $region56
      $region55: #{disparity_classification_loss.1} parent=51 // pred_region
        %p719 = scmp.lt.s32.totalorder %s25, 1
        %s720 = scalar_select %p719, %s25, 1
        %p721 = scmp.lt.s32.totalorder %s26, 0
        %s722 = scalar_select %p721, %s26, 0
        %s723 = smul.addr %s722, 2
        %s724 = smul.addr %s720, 2
        %s725 = sadd.s32 %s723, %s724
        %s726 = scalar_lea.vmem %s4, %s725
      $region56: #{disparity_classification_loss.1} parent=51 // pred_fallthru
        _
      // Predicated region
      $region57: #{disparity_classification_loss.1} parent=51 // pred_check
        %p727 = pneg %p210
      $region58: #{disparity_classification_loss.1} parent=51 // pred_check_branch
        %729 = sbr.rel (%p727) target = $region60
      $region59: #{disparity_classification_loss.1} parent=51 // pred_region
        %p730 = scmp.lt.s32.totalorder %s25, 1
        %s731 = scalar_select %p730, %s25, 1
        %p732 = scmp.lt.s32.totalorder %s26, 0
        %s733 = scalar_select %p732, %s26, 0
        %s734 = smul.addr %s733, 2
        %s735 = smul.addr %s731, 2
        %s736 = sadd.s32 %s734, %s735
        %s737 = scalar_lea.vmem %s5, %s736
      $region60: #{disparity_classification_loss.1} parent=51 // pred_fallthru
        _
    $region52: #{disparity_classification_loss.1} parent=5 // pred_fallthru
      _
  $region6: #{disparity_classification_loss.1} parent=0 // loop_footer
    %s16 = sadd.s32 1, %s12
  $region7: #{disparity_classification_loss.1} parent=0 // loop_footer_branch
    %11 = sbr.rel target = $region3
  $region8: #{disparity_classification_loss.1} parent=0 // loop_exit
    _

</llo_original>
